<compile_context>
chip_gen: v7x
topology: tpu7x:2x2x1
jax: 0.10.0
libtpu: 0.0.40
codegen_flags: <defaults>
</compile_context>

<pallas_src>
import functools

import jax
import jax.numpy as jnp
from jax.experimental import pallas as pl
from jax.experimental.pallas import tpu as pltpu

_LANES = 128
_MAX_TILE_ROWS = 2048     # 2048 x 128 x f32 = 1 MiB per input block


def _fpn_bce_sum_kernel(t_ref, *refs, tile_rows, valid_rows, need_mask):
    """One row-tile grid step: stable BCE-with-logits for all L levels + flat-sum accumulate.

    t_ref   : (tile_rows, last) shared targets tile            (VMEM)
    refs    : L logits tiles (tile_rows, last) + (L, 1) output (VMEM..., SMEM)
    The (L, 1) SMEM output is resident across the whole grid (accumulator).
    """
    x_refs = refs[:-1]
    out_ref = refs[-1]
    num_levels = len(x_refs)
    k = pl.program_id(0)

    @pl.when(k == 0)
    def _():
        for l in range(num_levels):
            out_ref[l, 0] = jnp.float32(0.0)

    # Targets loaded + cast ONCE per row tile, reused across all levels.
    t = t_ref[...].astype(jnp.float32)

    if need_mask:
        # Only the final partial row tile contains out-of-range (garbage) rows.
        row = jax.lax.broadcasted_iota(jnp.int32, t.shape, 0)
        in_range = (k * tile_rows + row) < valid_rows

    for l, x_ref in enumerate(x_refs):          # L is small (3-5): fully unrolled
        x = x_ref[...].astype(jnp.float32)
        # Numerically stable BCE-with-logits (reduction='none'):
        #   loss = max(x, 0) - x*t + log1p(exp(-|x|))
        loss = jnp.maximum(x, 0.0) - x * t + jnp.log1p(jnp.exp(-jnp.abs(x)))
        if need_mask:
            loss = jnp.where(in_range, loss, 0.0)
        # Single flat reduction per level; no [N] intermediate.
        out_ref[l, 0] = out_ref[l, 0] + jnp.sum(loss)


def fpn_bce_loss(logits_fpn, targets, targets_softmax=(None,)):
    """JAX/Pallas equivalent of FPNBCELoss.forward (module defaults).

    logits_fpn: list of [N, C] arrays (one per FPN level, same shape).
    targets:    [N, C] array of {0,1} (or soft) labels.
    Returns (loss_record, None) matching the PyTorch module.
    """
    # TODO(synk): sample_weight (ratio2weight) and label-smoothing branches are
    # disabled by the module defaults and are not implemented here.
    L = len(logits_fpn)
    n, c = logits_fpn[0].shape
    for lg in logits_fpn:
        assert lg.shape == (n, c)
    assert targets.shape == (n, c)

    n_valid = n * c

    # ---- layout: lane-dense reshape only when it is free (no pad, no copy) ---
    if n_valid % _LANES == 0:
        rows, last = n_valid // _LANES, _LANES
        xs = [jnp.reshape(lg, (rows, last)) for lg in logits_fpn]
        t = jnp.reshape(targets, (rows, last))
    else:
        # Natural [N, C] layout: C is the (full-extent) lane dim. No staging copy.
        rows, last = n, c
        xs = list(logits_fpn)
        t = targets

    # ---- row tiling -----------------------------------------------------------
    if rows <= _MAX_TILE_ROWS:
        tile_rows = rows                       # single full-extent block
        num_tiles = 1
        need_mask = False
    else:
        tile_rows = _MAX_TILE_ROWS             # multiple of 8 (sublane-aligned)
        num_tiles = pl.cdiv(rows, tile_rows)
        need_mask = (rows % tile_rows) != 0    # mask garbage rows of last block only

    kernel = functools.partial(
        _fpn_bce_sum_kernel,
        tile_rows=tile_rows,
        valid_rows=rows,
        need_mask=need_mask,
    )

    # Same tile shape / index map for targets and every logits level; with a
    # single row-tile grid axis each block is DMA'd exactly once.
    # (If profiling on v5e shows exposed DMA at large tiles, add
    #  pipeline_mode=pl.Buffered(3) to the logits specs.)
    tile_spec = pl.BlockSpec((tile_rows, last), lambda k: (k, 0))

    cost = pl.CostEstimate(
        flops=6 * L * n_valid,
        transcendentals=2 * L * n_valid,
        bytes_accessed=L * n_valid * logits_fpn[0].dtype.itemsize
        + n_valid * targets.dtype.itemsize
        + L * 4,
    )

    sums = pl.pallas_call(
        kernel,
        out_shape=jax.ShapeDtypeStruct((L, 1), jnp.float32),
        grid_spec=pl.GridSpec(
            grid=(num_tiles,),
            in_specs=[tile_spec] + [tile_spec] * L,
            # Per-level loss sums accumulate in a resident SMEM buffer.
            out_specs=pl.BlockSpec(memory_space=pltpu.SMEM),
        ),
        compiler_params=pltpu.CompilerParams(
            dimension_semantics=("arbitrary",),   # reduction axis (accumulator resident)
            vmem_limit_bytes=32 * 1024 * 1024,    # headroom for (L+1) double-buffered 1 MiB blocks
        ),
        cost_estimate=cost,
    )(t, *xs)

    # sum(axis=1).mean() == sum(all) / N ; scale once, outside the hot loop.
    loss_record = [sums[i, 0] / n for i in range(L)]
    return loss_record, None


if __name__ == "__main__":
    key = jax.random.PRNGKey(0)
    k1, k2, k3, k4 = jax.random.split(key, 4)

    N, C = 8, 32          # batch, num attributes
    logits_fpn = [
        jax.random.normal(k, (N, C), dtype=jnp.float32) for k in (k1, k2, k3)
    ]
    targets = (jax.random.uniform(k4, (N, C)) > 0.5).astype(jnp.float32)

    loss_record, aux = fpn_bce_loss(logits_fpn, targets)
    loss_record = [jax.block_until_ready(v) for v in loss_record]

    # Reference check in plain JAX (same math as F.binary_cross_entropy_with_logits).
    def ref_loss(x, t):
        lm = jnp.maximum(x, 0.0) - x * t + jnp.log1p(jnp.exp(-jnp.abs(x)))
        return jnp.mean(jnp.sum(lm, axis=1))

    for lgt, got in zip(logits_fpn, loss_record):
        want = ref_loss(lgt, targets)
        assert jnp.allclose(got, want, rtol=1e-5, atol=1e-5), (got, want)
    assert aux is None

    print("KERNEL_OK")
</pallas_src>

<mosaic_0001>
module attributes {stable_mosaic.version = 11 : i64} {
  func.func @_fpn_bce_sum_kernel(%arg0: i32, %arg1: memref<2x128xf32, #tpu.memory_space<vmem>>, %arg2: memref<2x128xf32, #tpu.memory_space<vmem>>, %arg3: memref<2x128xf32, #tpu.memory_space<vmem>>, %arg4: memref<2x128xf32, #tpu.memory_space<vmem>>, %arg5: memref<3x1xf32, #tpu.memory_space<smem>>) attributes {dimension_semantics = [#tpu.dimension_semantics<arbitrary>], iteration_bounds = array<i64: 1>, scalar_prefetch = 0 : i64, scratch_operands = 0 : i64, tpu.core_type = #tpu.core_type<tc>, window_params = [{transform_indices = @transform_0, window_bounds = array<i64: 2, 128>}, {transform_indices = @transform_1, window_bounds = array<i64: 2, 128>}, {transform_indices = @transform_2, window_bounds = array<i64: 2, 128>}, {transform_indices = @transform_3, window_bounds = array<i64: 2, 128>}, {transform_indices = @transform_4, window_bounds = array<i64: 3, 1>}]} {
    %c0_i32 = arith.constant 0 : i32
    %0 = arith.cmpi eq, %arg0, %c0_i32 : i32
    %1 = arith.extui %0 : i1 to i32
    %c0_i32_0 = arith.constant 0 : i32
    %2 = arith.cmpi ne, %1, %c0_i32_0 : i32
    scf.if %2 {
      %cst_26 = arith.constant 0.000000e+00 : f32
      %c0_27 = arith.constant 0 : index
      %c0_28 = arith.constant 0 : index
      %58 = memref.load %arg5[%c0_27, %c0_28] : memref<3x1xf32, #tpu.memory_space<smem>>
      memref.store %cst_26, %arg5[%c0_27, %c0_28] : memref<3x1xf32, #tpu.memory_space<smem>>
      %cst_29 = arith.constant 0.000000e+00 : f32
      %c1_30 = arith.constant 1 : index
      %c0_31 = arith.constant 0 : index
      %59 = memref.load %arg5[%c1_30, %c0_31] : memref<3x1xf32, #tpu.memory_space<smem>>
      memref.store %cst_29, %arg5[%c1_30, %c0_31] : memref<3x1xf32, #tpu.memory_space<smem>>
      %cst_32 = arith.constant 0.000000e+00 : f32
      %c2_33 = arith.constant 2 : index
      %c0_34 = arith.constant 0 : index
      %60 = memref.load %arg5[%c2_33, %c0_34] : memref<3x1xf32, #tpu.memory_space<smem>>
      memref.store %cst_32, %arg5[%c2_33, %c0_34] : memref<3x1xf32, #tpu.memory_space<smem>>
    } else {
    }
    %c0 = arith.constant 0 : index
    %c0_1 = arith.constant 0 : index
    %3 = vector.load %arg1[%c0, %c0_1] : memref<2x128xf32, #tpu.memory_space<vmem>>, vector<2x128xf32>
    %c0_2 = arith.constant 0 : index
    %c0_3 = arith.constant 0 : index
    %4 = vector.load %arg2[%c0_2, %c0_3] : memref<2x128xf32, #tpu.memory_space<vmem>>, vector<2x128xf32>
    %cst = arith.constant 0.000000e+00 : f32
    %5 = vector.broadcast %cst : f32 to vector<2x128xf32>
    %6 = arith.maximumf %4, %5 : vector<2x128xf32>
    %7 = arith.mulf %4, %3 : vector<2x128xf32>
    %8 = arith.subf %6, %7 : vector<2x128xf32>
    %9 = math.absf %4 : vector<2x128xf32>
    %cst_4 = arith.constant 0.000000e+00 : f32
    %10 = vector.broadcast %cst_4 : f32 to vector<2x128xf32>
    %11 = arith.subf %10, %9 : vector<2x128xf32>
    %12 = math.exp %11 : vector<2x128xf32>
    %13 = math.log1p %12 : vector<2x128xf32>
    %14 = arith.addf %8, %13 : vector<2x128xf32>
    %c0_5 = arith.constant 0 : index
    %c0_6 = arith.constant 0 : index
    %15 = memref.load %arg5[%c0_5, %c0_6] : memref<3x1xf32, #tpu.memory_space<smem>>
    %16 = vector.shape_cast %14 : vector<2x128xf32> to vector<1x2x128xf32>
    %cst_7 = arith.constant dense<0.000000e+00> : vector<1xf32>
    %17 = vector.multi_reduction <add>, %16, %cst_7 [1, 2] : vector<1x2x128xf32> to vector<1xf32>
    %18 = vector.shape_cast %17 : vector<1xf32> to vector<1x1x1xf32>
    %19 = vector.extract %18[0, 0, 0] : f32 from vector<1x1x1xf32>
    %20 = arith.addf %15, %19 : f32
    %c0_8 = arith.constant 0 : index
    %c0_9 = arith.constant 0 : index
    %21 = memref.load %arg5[%c0_8, %c0_9] : memref<3x1xf32, #tpu.memory_space<smem>>
    memref.store %20, %arg5[%c0_8, %c0_9] : memref<3x1xf32, #tpu.memory_space<smem>>
    %c0_10 = arith.constant 0 : index
    %c0_11 = arith.constant 0 : index
    %22 = vector.load %arg3[%c0_10, %c0_11] : memref<2x128xf32, #tpu.memory_space<vmem>>, vector<2x128xf32>
    %cst_12 = arith.constant 0.000000e+00 : f32
    %23 = vector.broadcast %cst_12 : f32 to vector<2x128xf32>
    %24 = arith.maximumf %22, %23 : vector<2x128xf32>
    %25 = arith.mulf %22, %3 : vector<2x128xf32>
    %26 = arith.subf %24, %25 : vector<2x128xf32>
    %27 = math.absf %22 : vector<2x128xf32>
    %cst_13 = arith.constant 0.000000e+00 : f32
    %28 = vector.broadcast %cst_13 : f32 to vector<2x128xf32>
    %29 = arith.subf %28, %27 : vector<2x128xf32>
    %30 = math.exp %29 : vector<2x128xf32>
    %31 = math.log1p %30 : vector<2x128xf32>
    %32 = arith.addf %26, %31 : vector<2x128xf32>
    %c1 = arith.constant 1 : index
    %c0_14 = arith.constant 0 : index
    %33 = memref.load %arg5[%c1, %c0_14] : memref<3x1xf32, #tpu.memory_space<smem>>
    %34 = vector.shape_cast %32 : vector<2x128xf32> to vector<1x2x128xf32>
    %cst_15 = arith.constant dense<0.000000e+00> : vector<1xf32>
    %35 = vector.multi_reduction <add>, %34, %cst_15 [1, 2] : vector<1x2x128xf32> to vector<1xf32>
    %36 = vector.shape_cast %35 : vector<1xf32> to vector<1x1x1xf32>
    %37 = vector.extract %36[0, 0, 0] : f32 from vector<1x1x1xf32>
    %38 = arith.addf %33, %37 : f32
    %c1_16 = arith.constant 1 : index
    %c0_17 = arith.constant 0 : index
    %39 = memref.load %arg5[%c1_16, %c0_17] : memref<3x1xf32, #tpu.memory_space<smem>>
    memref.store %38, %arg5[%c1_16, %c0_17] : memref<3x1xf32, #tpu.memory_space<smem>>
    %c0_18 = arith.constant 0 : index
    %c0_19 = arith.constant 0 : index
    %40 = vector.load %arg4[%c0_18, %c0_19] : memref<2x128xf32, #tpu.memory_space<vmem>>, vector<2x128xf32>
    %cst_20 = arith.constant 0.000000e+00 : f32
    %41 = vector.broadcast %cst_20 : f32 to vector<2x128xf32>
    %42 = arith.maximumf %40, %41 : vector<2x128xf32>
    %43 = arith.mulf %40, %3 : vector<2x128xf32>
    %44 = arith.subf %42, %43 : vector<2x128xf32>
    %45 = math.absf %40 : vector<2x128xf32>
    %cst_21 = arith.constant 0.000000e+00 : f32
    %46 = vector.broadcast %cst_21 : f32 to vector<2x128xf32>
    %47 = arith.subf %46, %45 : vector<2x128xf32>
    %48 = math.exp %47 : vector<2x128xf32>
    %49 = math.log1p %48 : vector<2x128xf32>
    %50 = arith.addf %44, %49 : vector<2x128xf32>
    %c2 = arith.constant 2 : index
    %c0_22 = arith.constant 0 : index
    %51 = memref.load %arg5[%c2, %c0_22] : memref<3x1xf32, #tpu.memory_space<smem>>
    %52 = vector.shape_cast %50 : vector<2x128xf32> to vector<1x2x128xf32>
    %cst_23 = arith.constant dense<0.000000e+00> : vector<1xf32>
    %53 = vector.multi_reduction <add>, %52, %cst_23 [1, 2] : vector<1x2x128xf32> to vector<1xf32>
    %54 = vector.shape_cast %53 : vector<1xf32> to vector<1x1x1xf32>
    %55 = vector.extract %54[0, 0, 0] : f32 from vector<1x1x1xf32>
    %56 = arith.addf %51, %55 : f32
    %c2_24 = arith.constant 2 : index
    %c0_25 = arith.constant 0 : index
    %57 = memref.load %arg5[%c2_24, %c0_25] : memref<3x1xf32, #tpu.memory_space<smem>>
    memref.store %56, %arg5[%c2_24, %c0_25] : memref<3x1xf32, #tpu.memory_space<smem>>
    return
  }
  func.func @transform_0(%arg0: i32) -> (i32, i32) {
    %c0_i32 = arith.constant 0 : i32
    %c0_i32_0 = arith.constant 0 : i32
    return %arg0, %c0_i32 : i32, i32
  }
  func.func @transform_1(%arg0: i32) -> (i32, i32) {
    %c0_i32 = arith.constant 0 : i32
    %c0_i32_0 = arith.constant 0 : i32
    return %arg0, %c0_i32 : i32, i32
  }
  func.func @transform_2(%arg0: i32) -> (i32, i32) {
    %c0_i32 = arith.constant 0 : i32
    %c0_i32_0 = arith.constant 0 : i32
    return %arg0, %c0_i32 : i32, i32
  }
  func.func @transform_3(%arg0: i32) -> (i32, i32) {
    %c0_i32 = arith.constant 0 : i32
    %c0_i32_0 = arith.constant 0 : i32
    return %arg0, %c0_i32 : i32, i32
  }
  func.func @transform_4(%arg0: i32) -> (i32, i32) {
    %c0_i32 = arith.constant 0 : i32
    %c0_i32_0 = arith.constant 0 : i32
    %c0_i32_1 = arith.constant 0 : i32
    return %c0_i32, %c0_i32_0 : i32, i32
  }
}

</mosaic_0001>

<llo_original>
// kernel: tpu_custom_call.1
$region0: #{tpu_custom_call.1}
  #allocation0 [shape = 'u32[]', space=smem, size = 0x4, offset = 0x4, fixed_abs, tag = 'smem constant byte address 0x4 - core index']
  #allocation1 [shape = 'u32[144,128]{1,0:T(1,128)}', space=vmem, size = 0x12000, scoped, tag = 'internal scratch']
  %s0 = inlined_call_operand.hbm [shape: f32[2,128], index: 0, kind: input, shape index: {}]
  %s1 = inlined_call_operand.vmem [shape: f32[2,128], index: 1, kind: input, shape index: {}]
  %s2 = inlined_call_operand.vmem [shape: f32[2,128], index: 2, kind: input, shape index: {}]
  %s3 = inlined_call_operand.vmem [shape: f32[2,128], index: 3, kind: input, shape index: {}]
  %s4 = inlined_call_operand.vmem [shape: f32[3,1], index: 4, kind: output, shape index: {}]
  %s5 = sld [smem:[#allocation0]]
  $region34: #{tpu_custom_call.1} parent=0
    _
  %s7 = ssub.s32 1, %s5
  %s8 = scalar_select 0, %s7, %s5
  $region1: #{tpu_custom_call.1} parent=0
    #allocation2 [shape = 'u8[1024]{0}', space=vmem, size = 0x400, scoped, tag = 'input window, operand 0, single buffered']
    #allocation3 [shape = 's32[1]{0}', space=sflag, size = 0x4, scoped, tag = 'scoped memory for tpu_custom_call.1']
    #allocation4 [shape = 's32[1]{0}', space=sflag, size = 0x4, scoped, tag = 'scoped memory for tpu_custom_call.1']
    #allocation5 [shape = 'u8[2048]{0}', space=smem, size = 0x800, scoped, tag = 'output window, operand 0, single buffered']
    %9 = vsyncpa [#allocation3], 0
    %10 = vsyncpa [#allocation4], 0
    // Predicated region
    $region2: #{tpu_custom_call.1} parent=1 // pred_check
      _
    $region3: #{tpu_custom_call.1} parent=1 // pred_check_branch
      %12 = sbr.rel (0) target = $region5
    $region4: #{tpu_custom_call.1} parent=1 // pred_region
      %s14 = ssub.s32 32, 32
      %15 = vsyncadd [#allocation3], %s14
      %s17 = sshll.u32 [#allocation2], 4
      %s18 = int_to_ptr.vmem [resolvable:$true] %s17
      %20 = dma.hbm_to_vmem [thread:$0]  %s0, 32, %s18, [#allocation3]
    $region5: #{tpu_custom_call.1} parent=1 // pred_fallthru
      _
    // Predicated region
    $region6: #{tpu_custom_call.1} parent=1 // pred_check
      _
    $region7: #{tpu_custom_call.1} parent=1 // pred_check_branch
      %22 = sbr.rel (0) target = $region9
    $region8: #{tpu_custom_call.1} parent=1 // pred_region
      _
    $region9: #{tpu_custom_call.1} parent=1 // pred_fallthru
      _
    // Predicated region
    $region10: #{tpu_custom_call.1} parent=1 // pred_check
      _
    $region11: #{tpu_custom_call.1} parent=1 // pred_check_branch
      %24 = sbr.rel (0) target = $region13
    $region12: #{tpu_custom_call.1} parent=1 // pred_region
      _
    $region13: #{tpu_custom_call.1} parent=1 // pred_fallthru
      _
    // Predicated region
    $region14: #{tpu_custom_call.1} parent=1 // pred_check
      _
    $region15: #{tpu_custom_call.1} parent=1 // pred_check_branch
      %26 = sbr.rel (0) target = $region17
    $region16: #{tpu_custom_call.1} parent=1 // pred_region
      _
    $region17: #{tpu_custom_call.1} parent=1 // pred_fallthru
      _
    // Predicated region
    $region18: #{tpu_custom_call.1} parent=1 // pred_check
      _
    $region19: #{tpu_custom_call.1} parent=1 // pred_check_branch
      %28 = sbr.rel (0) target = $region21
    $region20: #{tpu_custom_call.1} parent=1 // pred_region
      %29 = dma.done [#allocation3], 32
    $region21: #{tpu_custom_call.1} parent=1 // pred_fallthru
      _
    %p30 = scmp.eq.s32.totalorder 0, 0
    // Predicated region
    $region22: #{tpu_custom_call.1} parent=1 // pred_check
      %p31 = pneg %p30
    $region23: #{tpu_custom_call.1} parent=1 // pred_check_branch
      %33 = sbr.rel (%p31) target = $region25
    $region24: #{tpu_custom_call.1} parent=1 // pred_region
      %s34 = scalar_lea.smem [#allocation5], 0
      %35 = sst [smem:[%s34]] 0.0
      %s36 = scalar_lea.smem [#allocation5], 128
      %37 = sst [smem:[%s36]] 0.0
      %s38 = scalar_lea.smem [#allocation5], 256
      %39 = sst [smem:[%s38]] 0.0
    $region25: #{tpu_custom_call.1} parent=1 // pred_fallthru
      _
    %v40 = vld [vmem:[#allocation2] sm:$0x3]
    %v41 = vld [vmem:[%s1] sm:$0x3]
    %v42 = vmax.f32 %v41, 0.0
    %v43 = vmul.f32 %v41, %v40
    %v44 = vsub.f32 %v42, %v43
    %v45 = vand.u32 2147483647, %v41
    %v46 = vsub.f32 0.0, %v45
    %v47 = vmul.f32 %v46, 1.442695
    %v48 = vpow.pop %v47
    %v49 = vadd.f32 %v48, 1.0
    %v50 = vlog2.pop %v49
    %v51 = vmul.f32 %v50, 0.6931472
    %v52 = vmul.f32 -0.5, %v48
    %v53 = vadd.f32 %v52, 1.0
    %v54 = vmul.f32 %v53, %v48
    %v55 = vand.u32 2147483647, %v48
    %vm56 = vcmp.lt.f32.partialorder %v55, 0.0004427343
    %v57 = vsel %vm56, %v54, %v51
    %v58 = vadd.f32 %v44, %v57
    %s59 = sld [smem:[#allocation5]]
    %vm60 = vcmask 1041408
    %v61 = vsel %vm60, %v58, 0.0
    %62 = vadd.xlane.f32.xlu0 %v61
    %v63 = vpop.xlane.xlu0 %62
    %v64 = vrot.slane %v63, 4
    %v65 = vadd.f32 %v63, %v64
    %v66 = vrot.slane %v65, 2
    %v67 = vadd.f32 %v65, %v66
    %v68 = vrot.slane %v67, 1
    %v69 = vadd.f32 %v67, %v68
    %s70 = vtos %v69
    %s71 = sadd.f32 %s59, %s70
    %s72 = scalar_lea.smem [#allocation5], 0
    %73 = sst [smem:[%s72]] %s71
    %v74 = vld [vmem:[%s2] sm:$0x3]
    %v75 = vmax.f32 %v74, 0.0
    %v76 = vmul.f32 %v74, %v40
    %v77 = vsub.f32 %v75, %v76
    %v78 = vand.u32 2147483647, %v74
    %v79 = vsub.f32 0.0, %v78
    %v80 = vmul.f32 %v79, 1.442695
    %v81 = vpow.pop %v80
    %v82 = vadd.f32 %v81, 1.0
    %v83 = vlog2.pop %v82
    %v84 = vmul.f32 %v83, 0.6931472
    %v85 = vmul.f32 -0.5, %v81
    %v86 = vadd.f32 %v85, 1.0
    %v87 = vmul.f32 %v86, %v81
    %v88 = vand.u32 2147483647, %v81
    %vm89 = vcmp.lt.f32.partialorder %v88, 0.0004427343
    %v90 = vsel %vm89, %v87, %v84
    %v91 = vadd.f32 %v77, %v90
    %s92 = sld [smem:[#allocation5 + $0x80]]
    %v93 = vsel %vm60, %v91, 0.0
    %94 = vadd.xlane.f32.xlu0 %v93
    %v95 = vpop.xlane.xlu0 %94
    %v96 = vrot.slane %v95, 4
    %v97 = vadd.f32 %v95, %v96
    %v98 = vrot.slane %v97, 2
    %v99 = vadd.f32 %v97, %v98
    %v100 = vrot.slane %v99, 1
    %v101 = vadd.f32 %v99, %v100
    %s102 = vtos %v101
    %s103 = sadd.f32 %s92, %s102
    %s104 = scalar_lea.smem [#allocation5], 128
    %105 = sst [smem:[%s104]] %s103
    %v106 = vld [vmem:[%s3] sm:$0x3]
    %v107 = vmax.f32 %v106, 0.0
    %v108 = vmul.f32 %v106, %v40
    %v109 = vsub.f32 %v107, %v108
    %v110 = vand.u32 2147483647, %v106
    %v111 = vsub.f32 0.0, %v110
    %v112 = vmul.f32 %v111, 1.442695
    %v113 = vpow.pop %v112
    %v114 = vadd.f32 %v113, 1.0
    %v115 = vlog2.pop %v114
    %v116 = vmul.f32 %v115, 0.6931472
    %v117 = vmul.f32 -0.5, %v113
    %v118 = vadd.f32 %v117, 1.0
    %v119 = vmul.f32 %v118, %v113
    %v120 = vand.u32 2147483647, %v113
    %vm121 = vcmp.lt.f32.partialorder %v120, 0.0004427343
    %v122 = vsel %vm121, %v119, %v116
    %v123 = vadd.f32 %v109, %v122
    %s124 = sld [smem:[#allocation5 + $0x100]]
    %v125 = vsel %vm60, %v123, 0.0
    %126 = vadd.xlane.f32.xlu0 %v125
    %v127 = vpop.xlane.xlu0 %126
    %v128 = vrot.slane %v127, 4
    %v129 = vadd.f32 %v127, %v128
    %v130 = vrot.slane %v129, 2
    %v131 = vadd.f32 %v129, %v130
    %v132 = vrot.slane %v131, 1
    %v133 = vadd.f32 %v131, %v132
    %s134 = vtos %v133
    %s135 = sadd.f32 %s124, %s134
    %s136 = scalar_lea.smem [#allocation5], 256
    %137 = sst [smem:[%s136]] %s135
    // Predicated region
    $region26: #{tpu_custom_call.1} parent=1 // pred_check
      _
    $region27: #{tpu_custom_call.1} parent=1 // pred_check_branch
      %139 = sbr.rel (0) target = $region29
    $region28: #{tpu_custom_call.1} parent=1 // pred_region
      %s141 = ssub.s32 64, 64
      %142 = vsyncadd [#allocation4], %s141
      %s144 = sshll.u32 %s4, 4
      %s145 = int_to_ptr.vmem [resolvable:$true] %s144
      %147 = dma.smem_to_vmem [#allocation5], 64, %s145, [#allocation4]
    $region29: #{tpu_custom_call.1} parent=1 // pred_fallthru
      _
    // Predicated region
    $region30: #{tpu_custom_call.1} parent=1 // pred_check
      _
    $region31: #{tpu_custom_call.1} parent=1 // pred_check_branch
      %149 = sbr.rel (0) target = $region33
    $region32: #{tpu_custom_call.1} parent=1 // pred_region
      %150 = dma.done [#allocation4], 64
    $region33: #{tpu_custom_call.1} parent=1 // pred_fallthru
      _
    %151 = sfence
    %152 = vsyncpa [#allocation3], 1
    %153 = vsyncpa [#allocation4], 1

</llo_original>
